<compile_context>
chip_gen: v5e
topology: v5e:2x2
jax: 0.10.0
libtpu: 0.0.40
codegen_flags: <defaults>
</compile_context>

<pallas_src>
import functools

import jax
import jax.numpy as jnp
from jax.experimental import pallas as pl
from jax.experimental.pallas import tpu as pltpu

_LANE = 128          # TPU lane width
_TILE = 256          # A_hat row/col tile (multiple of 128 and 256)


def _round_up(x, m):
    return ((x + m - 1) // m) * m


def _pad2d(a, rows, cols):
    return jnp.pad(a, ((0, rows - a.shape[0]), (0, cols - a.shape[1])))


# --------------------------------------------------------------------------
# Pallas kernel: one GCNConv layer  out = act(A_hat @ (X @ W) + b)
# --------------------------------------------------------------------------
def _gcn_layer_kernel(a_ref, x_ref, w_ref, b_ref, o_ref, acc_ref, *, apply_relu):
    k = pl.program_id(1)

    @pl.when(k == 0)
    def _init():
        acc_ref[...] = jnp.zeros_like(acc_ref)

    # (tk, F_pad) @ (F_pad, H_pad) on the MXU, f32 accumulate, back to bf16
    xw = jnp.dot(x_ref[...], w_ref[...], preferred_element_type=jnp.float32)
    xw = xw.astype(jnp.bfloat16)

    # (tm, tk) @ (tk, H_pad) accumulated into the resident f32 scratch
    acc_ref[...] += jnp.dot(a_ref[...], xw, preferred_element_type=jnp.float32)

    @pl.when(k == pl.num_programs(1) - 1)
    def _finalize():
        r = acc_ref[...] + b_ref[...]          # bias only once, at finalize
        if apply_relu:
            r = jnp.maximum(r, 0.0)
        o_ref[...] = r.astype(o_ref.dtype)


def _gcn_layer(a, feats, w, b, *, apply_relu, out_dtype, tm=_TILE, tk=_TILE):
    """a: (Np, Np) bf16, feats: (Np, Fp) bf16, w: (Fp, Hp) bf16, b: (1, Hp) f32."""
    n_pad = a.shape[0]
    f_in = feats.shape[1]
    f_out = w.shape[1]
    grid = (n_pad // tm, n_pad // tk)

    # Explicit VMEM budget: double-buffered inputs/outputs + accumulator.
    est = 2 * (tm * tk * 2 + tk * f_in * 2 + f_in * f_out * 2 + f_out * 4
               + tm * f_out * 4) + tm * f_out * 4
    vmem_limit = int(min(max(2 * est, 8 << 20), 48 << 20))

    kernel = functools.partial(_gcn_layer_kernel, apply_relu=apply_relu)

    return pl.pallas_call(
        kernel,
        out_shape=jax.ShapeDtypeStruct((n_pad, f_out), out_dtype),
        grid_spec=pltpu.PrefetchScalarGridSpec(
            num_scalar_prefetch=0,
            grid=grid,
            in_specs=[
                pl.BlockSpec((tm, tk), lambda i, k: (i, k)),        # A_hat tile
                pl.BlockSpec((tk, f_in), lambda i, k: (k, 0)),      # X col block
                pl.BlockSpec((f_in, f_out), lambda i, k: (0, 0)),   # W (resident)
                pl.BlockSpec((1, f_out), lambda i, k: (0, 0)),      # bias
            ],
            out_specs=pl.BlockSpec((tm, f_out), lambda i, k: (i, 0)),
            scratch_shapes=[pltpu.VMEM((tm, f_out), jnp.float32)],
        ),
        compiler_params=pltpu.CompilerParams(
            dimension_semantics=("parallel", "arbitrary"),
            vmem_limit_bytes=vmem_limit,
        ),
    )(a, feats, w, b)


# --------------------------------------------------------------------------
# JAX glue
# --------------------------------------------------------------------------
def build_normalized_adjacency(edge_index, num_nodes):
    """A_hat = D^{-1/2} (A + I) D^{-1/2} (binary edges; multi-edges deduped;
    diagonal set to exactly 1 so pre-existing self-loops are not double-counted)."""
    src, dst = edge_index[0], edge_index[1]
    adj = jnp.zeros((num_nodes, num_nodes), jnp.float32).at[dst, src].set(1.0)
    diag = jnp.arange(num_nodes)
    adj = adj.at[diag, diag].set(1.0)                     # add (remaining) self loops
    deg = adj.sum(axis=1)
    d_inv_sqrt = jnp.where(deg > 0, 1.0 / jnp.sqrt(deg), 0.0)
    return d_inv_sqrt[:, None] * adj * d_inv_sqrt[None, :]


def gcn_forward(x, edge_index, w1, b1, w2, b2):
    """Fused 2-layer GCN forward (conv1 -> relu -> dropout(eval) -> conv2)."""
    n, f = x.shape
    h_dim = w1.shape[1]
    o_dim = w2.shape[1]

    a_hat = build_normalized_adjacency(edge_index, n)

    # lane / tile padding
    n_pad = _round_up(max(n, 1), _TILE)
    f_pad = _round_up(max(f, 1), _LANE)
    h_pad = _round_up(max(h_dim, 1), _LANE)
    o_pad = _round_up(max(o_dim, 1), _LANE)

    a_p = _pad2d(a_hat, n_pad, n_pad).astype(jnp.bfloat16)
    x_p = _pad2d(x, n_pad, f_pad).astype(jnp.bfloat16)
    w1_p = _pad2d(w1, f_pad, h_pad).astype(jnp.bfloat16)
    b1_p = _pad2d(b1.reshape(1, -1), 1, h_pad).astype(jnp.float32)
    w2_p = _pad2d(w2, h_pad, o_pad).astype(jnp.bfloat16)
    b2_p = _pad2d(b2.reshape(1, -1), 1, o_pad).astype(jnp.float32)

    # layer 1: conv1 + ReLU (dropout = identity in eval mode)
    h = _gcn_layer(a_p, x_p, w1_p, b1_p, apply_relu=True, out_dtype=jnp.bfloat16)
    # layer 2: conv2
    out = _gcn_layer(a_p, h, w2_p, b2_p, apply_relu=False, out_dtype=jnp.float32)

    return out[:n, :o_dim]


def _gcn_reference(x, edge_index, w1, b1, w2, b2):
    a_hat = build_normalized_adjacency(edge_index, x.shape[0])
    h = jnp.maximum(a_hat @ (x @ w1) + b1, 0.0)
    return a_hat @ (h @ w2) + b2


def init_params(key, num_node_features, hidden_dim, output_dim):
    """Glorot-uniform weights, zero biases (PyG GCNConv default)."""
    k1, k2 = jax.random.split(key)

    def glorot(k, fan_in, fan_out):
        limit = jnp.sqrt(6.0 / (fan_in + fan_out))
        return jax.random.uniform(k, (fan_in, fan_out), jnp.float32, -limit, limit)

    w1 = glorot(k1, num_node_features, hidden_dim)
    b1 = jnp.zeros((1, hidden_dim), jnp.float32)
    w2 = glorot(k2, hidden_dim, output_dim)
    b2 = jnp.zeros((1, output_dim), jnp.float32)
    return w1, b1, w2, b2


if __name__ == "__main__":
    num_nodes = 16
    num_node_features = 8
    hidden_dim = 32
    output_dim = 16

    key = jax.random.PRNGKey(0)
    kx, kp, ke = jax.random.split(key, 3)

    # node features
    x = jax.random.normal(kx, (num_nodes, num_node_features), jnp.float32)

    # deterministic small graph: bidirectional ring + a few extra edges
    ring_src = jnp.arange(num_nodes, dtype=jnp.int32)
    ring_dst = (ring_src + 1) % num_nodes
    extra_src = jax.random.randint(ke, (8,), 0, num_nodes, dtype=jnp.int32)
    extra_dst = (extra_src + 5) % num_nodes
    src = jnp.concatenate([ring_src, ring_dst, extra_src, extra_dst])
    dst = jnp.concatenate([ring_dst, ring_src, extra_dst, extra_src])
    edge_index = jnp.stack([src, dst], axis=0)            # (2, 48)

    w1, b1, w2, b2 = init_params(kp, num_node_features, hidden_dim, output_dim)

    out = gcn_forward(x, edge_index, w1, b1, w2, b2)
    out = jax.block_until_ready(out)

    assert out.shape == (num_nodes, output_dim)
    assert bool(jnp.all(jnp.isfinite(out)))

    # loose check vs f32 reference (kernel runs bf16 inputs / f32 accumulation)
    ref = _gcn_reference(x, edge_index, w1, b1, w2, b2)
    max_err = float(jnp.max(jnp.abs(out - ref)))
    assert max_err < 0.1, f"max abs error vs reference too large: {max_err}"

    print("KERNEL_OK")
</pallas_src>

<mosaic_0001>
module attributes {stable_mosaic.version = 11 : i64} {
  func.func @_gcn_layer_kernel(%arg0: i32, %arg1: i32, %arg2: memref<256x256xbf16, #tpu.memory_space<vmem>>, %arg3: memref<256x128xbf16, #tpu.memory_space<vmem>>, %arg4: memref<128x128xbf16, #tpu.memory_space<vmem>>, %arg5: memref<1x128xf32, #tpu.memory_space<vmem>>, %arg6: memref<256x128xbf16, #tpu.memory_space<vmem>>, %arg7: memref<256x128xf32, #tpu.memory_space<vmem>>) attributes {dimension_semantics = [#tpu.dimension_semantics<parallel>, #tpu.dimension_semantics<arbitrary>], iteration_bounds = array<i64: 1, 1>, scalar_prefetch = 0 : i64, scratch_operands = 1 : i64, tpu.core_type = #tpu.core_type<tc>, window_params = [{transform_indices = @transform_0, window_bounds = array<i64: 256, 256>}, {transform_indices = @transform_1, window_bounds = array<i64: 256, 128>}, {pipeline_mode = #tpu.pipeline_mode<synchronous>, transform_indices = @transform_2, window_bounds = array<i64: 128, 128>}, {pipeline_mode = #tpu.pipeline_mode<synchronous>, transform_indices = @transform_3, window_bounds = array<i64: 1, 128>}, {transform_indices = @transform_4, window_bounds = array<i64: 256, 128>}]} {
    %c0_i32 = arith.constant 0 : i32
    %0 = arith.cmpi eq, %arg1, %c0_i32 : i32
    %1 = arith.extui %0 : i1 to i32
    %c0_i32_0 = arith.constant 0 : i32
    %2 = arith.cmpi ne, %1, %c0_i32_0 : i32
    scf.if %2 {
      %cst_13 = arith.constant 0.000000e+00 : f32
      %15 = vector.broadcast %cst_13 : f32 to vector<256x128xf32>
      %c0_14 = arith.constant 0 : index
      %c0_15 = arith.constant 0 : index
      %16 = vector.load %arg7[%c0_14, %c0_15] : memref<256x128xf32, #tpu.memory_space<vmem>>, vector<256x128xf32>
      tpu.vector_store %arg7[%c0_14, %c0_15], %15 {strides = array<i32>} : memref<256x128xf32, #tpu.memory_space<vmem>>, vector<256x128xf32>,
    } else {
    }
    %c0 = arith.constant 0 : index
    %c0_1 = arith.constant 0 : index
    %3 = vector.load %arg3[%c0, %c0_1] : memref<256x128xbf16, #tpu.memory_space<vmem>>, vector<256x128xbf16>
    %c0_2 = arith.constant 0 : index
    %c0_3 = arith.constant 0 : index
    %4 = vector.load %arg4[%c0_2, %c0_3] : memref<128x128xbf16, #tpu.memory_space<vmem>>, vector<128x128xbf16>
    %cst = arith.constant dense<0.000000e+00> : vector<256x128xf32>
    %5 = tpu.matmul %3, %4, %cst {dimension_numbers = #tpu.dot_dimension_numbers<[1], [0], [0], [1], [0, 0, 1, 1], [], []>} : vector<256x128xbf16>, vector<128x128xbf16>, vector<256x128xf32> -> vector<256x128xf32>
    %6 = arith.truncf %5 : vector<256x128xf32> to vector<256x128xbf16>
    %c0_4 = arith.constant 0 : index
    %c0_5 = arith.constant 0 : index
    %7 = vector.load %arg7[%c0_4, %c0_5] : memref<256x128xf32, #tpu.memory_space<vmem>>, vector<256x128xf32>
    %c0_6 = arith.constant 0 : index
    %c0_7 = arith.constant 0 : index
    %8 = vector.load %arg2[%c0_6, %c0_7] : memref<256x256xbf16, #tpu.memory_space<vmem>>, vector<256x256xbf16>
    %cst_8 = arith.constant dense<0.000000e+00> : vector<256x128xf32>
    %9 = tpu.matmul %8, %6, %cst_8 {dimension_numbers = #tpu.dot_dimension_numbers<[1], [0], [0], [1], [0, 0, 1, 1], [], []>} : vector<256x256xbf16>, vector<256x128xbf16>, vector<256x128xf32> -> vector<256x128xf32>
    %10 = arith.addf %7, %9 : vector<256x128xf32>
    %c0_9 = arith.constant 0 : index
    %c0_10 = arith.constant 0 : index
    %11 = vector.load %arg7[%c0_9, %c0_10] : memref<256x128xf32, #tpu.memory_space<vmem>>, vector<256x128xf32>
    tpu.vector_store %arg7[%c0_9, %c0_10], %10 {strides = array<i32>} : memref<256x128xf32, #tpu.memory_space<vmem>>, vector<256x128xf32>,
    %c0_i32_11 = arith.constant 0 : i32
    %12 = arith.cmpi eq, %arg1, %c0_i32_11 : i32
    %13 = arith.extui %12 : i1 to i32
    %c0_i32_12 = arith.constant 0 : i32
    %14 = arith.cmpi ne, %13, %c0_i32_12 : i32
    scf.if %14 {
      %c0_13 = arith.constant 0 : index
      %c0_14 = arith.constant 0 : index
      %15 = vector.load %arg7[%c0_13, %c0_14] : memref<256x128xf32, #tpu.memory_space<vmem>>, vector<256x128xf32>
      %c0_15 = arith.constant 0 : index
      %c0_16 = arith.constant 0 : index
      %16 = vector.load %arg5[%c0_15, %c0_16] : memref<1x128xf32, #tpu.memory_space<vmem>>, vector<1x128xf32>
      %17 = vector.broadcast %16 : vector<1x128xf32> to vector<256x128xf32>
      %18 = arith.addf %15, %17 : vector<256x128xf32>
      %cst_17 = arith.constant 0.000000e+00 : f32
      %19 = vector.broadcast %cst_17 : f32 to vector<256x128xf32>
      %20 = arith.maximumf %18, %19 : vector<256x128xf32>
      %21 = arith.truncf %20 : vector<256x128xf32> to vector<256x128xbf16>
      %c0_18 = arith.constant 0 : index
      %c0_19 = arith.constant 0 : index
      %22 = vector.load %arg6[%c0_18, %c0_19] : memref<256x128xbf16, #tpu.memory_space<vmem>>, vector<256x128xbf16>
      tpu.vector_store %arg6[%c0_18, %c0_19], %21 {strides = array<i32>} : memref<256x128xbf16, #tpu.memory_space<vmem>>, vector<256x128xbf16>,
    } else {
    }
    return
  }
  func.func @transform_0(%arg0: i32, %arg1: i32) -> (i32, i32) {
    %c0_i32 = arith.constant 0 : i32
    return %arg0, %arg1 : i32, i32
  }
  func.func @transform_1(%arg0: i32, %arg1: i32) -> (i32, i32) {
    %c0_i32 = arith.constant 0 : i32
    %c0_i32_0 = arith.constant 0 : i32
    return %arg1, %c0_i32 : i32, i32
  }
  func.func @transform_2(%arg0: i32, %arg1: i32) -> (i32, i32) {
    %c0_i32 = arith.constant 0 : i32
    %c0_i32_0 = arith.constant 0 : i32
    %c0_i32_1 = arith.constant 0 : i32
    return %c0_i32, %c0_i32_0 : i32, i32
  }
  func.func @transform_3(%arg0: i32, %arg1: i32) -> (i32, i32) {
    %c0_i32 = arith.constant 0 : i32
    %c0_i32_0 = arith.constant 0 : i32
    %c0_i32_1 = arith.constant 0 : i32
    return %c0_i32, %c0_i32_0 : i32, i32
  }
  func.func @transform_4(%arg0: i32, %arg1: i32) -> (i32, i32) {
    %c0_i32 = arith.constant 0 : i32
    %c0_i32_0 = arith.constant 0 : i32
    return %arg0, %c0_i32 : i32, i32
  }
}

</mosaic_0001>

<llo_original>
// kernel: tpu_custom_call.1
$region0: #{tpu_custom_call.1}
  #allocation0 [shape = 'u32[]', space=smem, size = 0x4, offset = 0x4, fixed_abs, tag = 'smem constant byte address 0x4 - core index']
  #allocation1 [shape = 'u32[72,128]{1,0:T(1,128)}', space=vmem, size = 0x9000, scoped, tag = 'internal scratch']
  #allocation2 [shape = 'f32[256,128]{1,0:T(8,128)}', space=vmem, size = 0x20000, scoped, tag = 'scratch operand']
  %s0 = inlined_call_operand.hbm [shape: bf16[256,256], index: 0, kind: input, shape index: {}]
  %s1 = inlined_call_operand.hbm [shape: bf16[256,128], index: 1, kind: input, shape index: {}]
  %s2 = inlined_call_operand.hbm [shape: bf16[128,128], index: 2, kind: input, shape index: {}]
  %s3 = inlined_call_operand.vmem [shape: f32[1,128], index: 3, kind: input, shape index: {}]
  %s4 = inlined_call_operand.hbm [shape: bf16[256,128], index: 4, kind: output, shape index: {}]
  %s5 = sld [smem:[#allocation0]]
  $region46: #{tpu_custom_call.1} parent=0
    _
  %s7 = ssub.s32 1, %s5
  %s8 = scalar_select 0, %s7, %s5
  $region1: #{tpu_custom_call.1} parent=0
    #allocation3 [shape = 'u8[131072]{0}', space=vmem, size = 0x20000, scoped, tag = 'input window, operand 0, single buffered']
    #allocation4 [shape = 's32[1]{0}', space=sflag, size = 0x4, scoped, tag = 'scoped memory for tpu_custom_call.1']
    #allocation5 [shape = 's32[1]{0}', space=sflag, size = 0x4, scoped, tag = 'scoped memory for tpu_custom_call.1']
    #allocation6 [shape = 'u8[65536]{0}', space=vmem, size = 0x10000, scoped, tag = 'input window, operand 1, single buffered']
    #allocation7 [shape = 's32[1]{0}', space=sflag, size = 0x4, scoped, tag = 'scoped memory for tpu_custom_call.1']
    #allocation8 [shape = 'u8[32768]{0}', space=vmem, size = 0x8000, scoped, tag = 'input window, operand 2, single buffered']
    #allocation9 [shape = 'u8[65536]{0}', space=vmem, size = 0x10000, scoped, tag = 'output window, operand 0, single buffered']
    %9 = vsyncpa [#allocation4], 0
    %10 = vsyncpa [#allocation7], 0
    %11 = vsyncpa [#allocation5], 0
    // Predicated region
    $region2: #{tpu_custom_call.1} parent=1 // pred_check
      _
    $region3: #{tpu_custom_call.1} parent=1 // pred_check_branch
      %13 = sbr.rel (0) target = $region5
    $region4: #{tpu_custom_call.1} parent=1 // pred_region
      %15 = vsyncadd [#allocation4], 0
      %s16 = sshll.u32 %s0, 4
      %s17 = int_to_ptr.hbm [resolvable:$true] %s16
      %s18 = sshll.u32 [#allocation3], 4
      %s19 = int_to_ptr.vmem [resolvable:$true] %s18
      %24 = dma.hbm_to_vmem [thread:$0]  %s17, 4096, %s19, [#allocation4], 128, 128, 8
    $region5: #{tpu_custom_call.1} parent=1 // pred_fallthru
      _
    // Predicated region
    $region6: #{tpu_custom_call.1} parent=1 // pred_check
      _
    $region7: #{tpu_custom_call.1} parent=1 // pred_check_branch
      %26 = sbr.rel (0) target = $region9
    $region8: #{tpu_custom_call.1} parent=1 // pred_region
      %28 = vsyncadd [#allocation7], 0
      %s29 = sshll.u32 %s1, 4
      %s30 = int_to_ptr.hbm [resolvable:$true] %s29
      %s31 = sshll.u32 [#allocation6], 4
      %s32 = int_to_ptr.vmem [resolvable:$true] %s31
      %37 = dma.hbm_to_vmem [thread:$0]  %s30, 2048, %s32, [#allocation7], 64, 64, 4
    $region9: #{tpu_custom_call.1} parent=1 // pred_fallthru
      _
    // Predicated region
    $region10: #{tpu_custom_call.1} parent=1 // pred_check
      _
    $region11: #{tpu_custom_call.1} parent=1 // pred_check_branch
      %39 = sbr.rel (0) target = $region13
    $region12: #{tpu_custom_call.1} parent=1 // pred_region
      %41 = vsyncadd [#allocation7], 0
      %s42 = sshll.u32 %s2, 4
      %s43 = int_to_ptr.hbm [resolvable:$true] %s42
      %s44 = sshll.u32 [#allocation8], 4
      %s45 = int_to_ptr.vmem [resolvable:$true] %s44
      %50 = dma.hbm_to_vmem [thread:$0]  %s43, 1024, %s45, [#allocation7], 64, 64, 4
    $region13: #{tpu_custom_call.1} parent=1 // pred_fallthru
      _
    // Predicated region
    $region14: #{tpu_custom_call.1} parent=1 // pred_check
      _
    $region15: #{tpu_custom_call.1} parent=1 // pred_check_branch
      %52 = sbr.rel (0) target = $region17
    $region16: #{tpu_custom_call.1} parent=1 // pred_region
      _
    $region17: #{tpu_custom_call.1} parent=1 // pred_fallthru
      _
    // Predicated region
    $region18: #{tpu_custom_call.1} parent=1 // pred_check
      _
    $region19: #{tpu_custom_call.1} parent=1 // pred_check_branch
      %54 = sbr.rel (0) target = $region21
    $region20: #{tpu_custom_call.1} parent=1 // pred_region
      %56 = dma.done [#allocation4], 4096
    $region21: #{tpu_custom_call.1} parent=1 // pred_fallthru
      _
    // Predicated region
    $region22: #{tpu_custom_call.1} parent=1 // pred_check
      _
    $region23: #{tpu_custom_call.1} parent=1 // pred_check_branch
      %58 = sbr.rel (0) target = $region25
    $region24: #{tpu_custom_call.1} parent=1 // pred_region
      %60 = dma.done [#allocation7], 2048
    $region25: #{tpu_custom_call.1} parent=1 // pred_fallthru
      _
    // Predicated region
    $region26: #{tpu_custom_call.1} parent=1 // pred_check
      _
    $region27: #{tpu_custom_call.1} parent=1 // pred_check_branch
      %62 = sbr.rel (0) target = $region29
    $region28: #{tpu_custom_call.1} parent=1 // pred_region
      %64 = dma.done [#allocation7], 1024
    $region29: #{tpu_custom_call.1} parent=1 // pred_fallthru
      _
    %p65 = scmp.eq.s32.totalorder 0, 0
    // Predicated region
    $region30: #{tpu_custom_call.1} parent=1 // pred_check
      %p66 = pneg %p65
    $region31: #{tpu_custom_call.1} parent=1 // pred_check_branch
      %68 = sbr.rel (%p66) target = $region33
    $region32: #{tpu_custom_call.1} parent=1 // pred_region
      %69 = vst [vmem:[#allocation2] sm:$0xff] 0.0
      %70 = vst [vmem:[#allocation2 + $0x8] sm:$0xff] 0.0
      %71 = vst [vmem:[#allocation2 + $0x10] sm:$0xff] 0.0
      %72 = vst [vmem:[#allocation2 + $0x18] sm:$0xff] 0.0
      %73 = vst [vmem:[#allocation2 + $0x20] sm:$0xff] 0.0
      %74 = vst [vmem:[#allocation2 + $0x28] sm:$0xff] 0.0
      %75 = vst [vmem:[#allocation2 + $0x30] sm:$0xff] 0.0
      %76 = vst [vmem:[#allocation2 + $0x38] sm:$0xff] 0.0
      %77 = vst [vmem:[#allocation2 + $0x40] sm:$0xff] 0.0
      %78 = vst [vmem:[#allocation2 + $0x48] sm:$0xff] 0.0
      %79 = vst [vmem:[#allocation2 + $0x50] sm:$0xff] 0.0
      %80 = vst [vmem:[#allocation2 + $0x58] sm:$0xff] 0.0
      %81 = vst [vmem:[#allocation2 + $0x60] sm:$0xff] 0.0
      %82 = vst [vmem:[#allocation2 + $0x68] sm:$0xff] 0.0
      %83 = vst [vmem:[#allocation2 + $0x70] sm:$0xff] 0.0
      %84 = vst [vmem:[#allocation2 + $0x78] sm:$0xff] 0.0
      %85 = vst [vmem:[#allocation2 + $0x80] sm:$0xff] 0.0
      %86 = vst [vmem:[#allocation2 + $0x88] sm:$0xff] 0.0
      %87 = vst [vmem:[#allocation2 + $0x90] sm:$0xff] 0.0
      %88 = vst [vmem:[#allocation2 + $0x98] sm:$0xff] 0.0
      %89 = vst [vmem:[#allocation2 + $0xa0] sm:$0xff] 0.0
      %90 = vst [vmem:[#allocation2 + $0xa8] sm:$0xff] 0.0
      %91 = vst [vmem:[#allocation2 + $0xb0] sm:$0xff] 0.0
      %92 = vst [vmem:[#allocation2 + $0xb8] sm:$0xff] 0.0
      %93 = vst [vmem:[#allocation2 + $0xc0] sm:$0xff] 0.0
      %94 = vst [vmem:[#allocation2 + $0xc8] sm:$0xff] 0.0
      %95 = vst [vmem:[#allocation2 + $0xd0] sm:$0xff] 0.0
      %96 = vst [vmem:[#allocation2 + $0xd8] sm:$0xff] 0.0
      %97 = vst [vmem:[#allocation2 + $0xe0] sm:$0xff] 0.0
      %98 = vst [vmem:[#allocation2 + $0xe8] sm:$0xff] 0.0
      %99 = vst [vmem:[#allocation2 + $0xf0] sm:$0xff] 0.0
      %100 = vst [vmem:[#allocation2 + $0xf8] sm:$0xff] 0.0
    $region33: #{tpu_custom_call.1} parent=1 // pred_fallthru
      _
    %v101 = vld [vmem:[#allocation6] sm:$0xf]
    %v102 = vld [vmem:[#allocation6 + $0x4] sm:$0xf]
    %v103 = vld [vmem:[#allocation6 + $0x8] sm:$0xf]
    %v104 = vld [vmem:[#allocation6 + $0xc] sm:$0xf]
    %v105 = vld [vmem:[#allocation6 + $0x10] sm:$0xf]
    %v106 = vld [vmem:[#allocation6 + $0x14] sm:$0xf]
    %v107 = vld [vmem:[#allocation6 + $0x18] sm:$0xf]
    %v108 = vld [vmem:[#allocation6 + $0x1c] sm:$0xf]
    %v109 = vld [vmem:[#allocation6 + $0x20] sm:$0xf]
    %v110 = vld [vmem:[#allocation6 + $0x24] sm:$0xf]
    %v111 = vld [vmem:[#allocation6 + $0x28] sm:$0xf]
    %v112 = vld [vmem:[#allocation6 + $0x2c] sm:$0xf]
    %v113 = vld [vmem:[#allocation6 + $0x30] sm:$0xf]
    %v114 = vld [vmem:[#allocation6 + $0x34] sm:$0xf]
    %v115 = vld [vmem:[#allocation6 + $0x38] sm:$0xf]
    %v116 = vld [vmem:[#allocation6 + $0x3c] sm:$0xf]
    %v117 = vld [vmem:[#allocation6 + $0x40] sm:$0xf]
    %v118 = vld [vmem:[#allocation6 + $0x44] sm:$0xf]
    %v119 = vld [vmem:[#allocation6 + $0x48] sm:$0xf]
    %v120 = vld [vmem:[#allocation6 + $0x4c] sm:$0xf]
    %v121 = vld [vmem:[#allocation6 + $0x50] sm:$0xf]
    %v122 = vld [vmem:[#allocation6 + $0x54] sm:$0xf]
    %v123 = vld [vmem:[#allocation6 + $0x58] sm:$0xf]
    %v124 = vld [vmem:[#allocation6 + $0x5c] sm:$0xf]
    %v125 = vld [vmem:[#allocation6 + $0x60] sm:$0xf]
    %v126 = vld [vmem:[#allocation6 + $0x64] sm:$0xf]
    %v127 = vld [vmem:[#allocation6 + $0x68] sm:$0xf]
    %v128 = vld [vmem:[#allocation6 + $0x6c] sm:$0xf]
    %v129 = vld [vmem:[#allocation6 + $0x70] sm:$0xf]
    %v130 = vld [vmem:[#allocation6 + $0x74] sm:$0xf]
    %v131 = vld [vmem:[#allocation6 + $0x78] sm:$0xf]
    %v132 = vld [vmem:[#allocation6 + $0x7c] sm:$0xf]
    %v133 = vld [vmem:[#allocation8] sm:$0xf]
    %v134 = vld [vmem:[#allocation8 + $0x4] sm:$0xf]
    %v135 = vld [vmem:[#allocation8 + $0x8] sm:$0xf]
    %v136 = vld [vmem:[#allocation8 + $0xc] sm:$0xf]
    %v137 = vld [vmem:[#allocation8 + $0x10] sm:$0xf]
    %v138 = vld [vmem:[#allocation8 + $0x14] sm:$0xf]
    %v139 = vld [vmem:[#allocation8 + $0x18] sm:$0xf]
    %v140 = vld [vmem:[#allocation8 + $0x1c] sm:$0xf]
    %v141 = vld [vmem:[#allocation8 + $0x20] sm:$0xf]
    %v142 = vld [vmem:[#allocation8 + $0x24] sm:$0xf]
    %v143 = vld [vmem:[#allocation8 + $0x28] sm:$0xf]
    %v144 = vld [vmem:[#allocation8 + $0x2c] sm:$0xf]
    %v145 = vld [vmem:[#allocation8 + $0x30] sm:$0xf]
    %v146 = vld [vmem:[#allocation8 + $0x34] sm:$0xf]
    %v147 = vld [vmem:[#allocation8 + $0x38] sm:$0xf]
    %v148 = vld [vmem:[#allocation8 + $0x3c] sm:$0xf]
    %v181 = vunpack.c.l.b16 %v101
    %v182 = vunpack.c.l.b16 %v102
    %v183 = vunpack.c.l.b16 %v103
    %v184 = vunpack.c.l.b16 %v104
    %v185 = vunpack.c.l.b16 %v105
    %v186 = vunpack.c.l.b16 %v106
    %v187 = vunpack.c.l.b16 %v107
    %v188 = vunpack.c.l.b16 %v108
    %v189 = vunpack.c.l.b16 %v109
    %v190 = vunpack.c.l.b16 %v110
    %v191 = vunpack.c.l.b16 %v111
    %v192 = vunpack.c.l.b16 %v112
    %v193 = vunpack.c.l.b16 %v113
    %v194 = vunpack.c.l.b16 %v114
    %v195 = vunpack.c.l.b16 %v115
    %v196 = vunpack.c.l.b16 %v116
    %v197 = vunpack.c.l.b16 %v117
    %v198 = vunpack.c.l.b16 %v118
    %v199 = vunpack.c.l.b16 %v119
    %v200 = vunpack.c.l.b16 %v120
    %v201 = vunpack.c.l.b16 %v121
    %v202 = vunpack.c.l.b16 %v122
    %v203 = vunpack.c.l.b16 %v123
    %v204 = vunpack.c.l.b16 %v124
    %v205 = vunpack.c.l.b16 %v125
    %v206 = vunpack.c.l.b16 %v126
    %v207 = vunpack.c.l.b16 %v127
    %v208 = vunpack.c.l.b16 %v128
    %v209 = vunpack.c.l.b16 %v129
    %v210 = vunpack.c.l.b16 %v130
    %v211 = vunpack.c.l.b16 %v131
    %v212 = vunpack.c.l.b16 %v132
    %v213 = vpack.c.b16 %v182, %v181
    %v214 = vpack.c.b16 %v184, %v183
    %v215 = vpack.c.b16 %v186, %v185
    %v216 = vpack.c.b16 %v188, %v187
    %v217 = vpack.c.b16 %v190, %v189
    %v218 = vpack.c.b16 %v192, %v191
    %v219 = vpack.c.b16 %v194, %v193
    %v220 = vpack.c.b16 %v196, %v195
    %v221 = vpack.c.b16 %v198, %v197
    %v222 = vpack.c.b16 %v200, %v199
    %v223 = vpack.c.b16 %v202, %v201
    %v224 = vpack.c.b16 %v204, %v203
    %v225 = vpack.c.b16 %v206, %v205
    %v226 = vpack.c.b16 %v208, %v207
    %v227 = vpack.c.b16 %v210, %v209
    %v228 = vpack.c.b16 %v212, %v211
    %v261 = vunpack.c.l.b16 %v133
    %v262 = vunpack.c.l.b16 %v134
    %v263 = vunpack.c.l.b16 %v135
    %v264 = vunpack.c.l.b16 %v136
    %v265 = vunpack.c.l.b16 %v137
    %v266 = vunpack.c.l.b16 %v138
    %v267 = vunpack.c.l.b16 %v139
    %v268 = vunpack.c.l.b16 %v140
    %v269 = vunpack.c.l.b16 %v141
    %v270 = vunpack.c.l.b16 %v142
    %v271 = vunpack.c.l.b16 %v143
    %v272 = vunpack.c.l.b16 %v144
    %v273 = vunpack.c.l.b16 %v145
    %v274 = vunpack.c.l.b16 %v146
    %v275 = vunpack.c.l.b16 %v147
    %v276 = vunpack.c.l.b16 %v148
    %v277 = vpack.c.b16 %v262, %v261
    %v278 = vpack.c.b16 %v264, %v263
    %v279 = vpack.c.b16 %v266, %v265
    %v280 = vpack.c.b16 %v268, %v267
    %v281 = vpack.c.b16 %v270, %v269
    %v282 = vpack.c.b16 %v272, %v271
    %v283 = vpack.c.b16 %v274, %v273
    %v284 = vpack.c.b16 %v276, %v275
    %293 = vmatpush.bf16.msra.mxu0 %v284
    %294 = vmatpush.bf16.msra.mxu0 %v283
    %295 = vmatpush.bf16.msra.mxu0 %v282
    %296 = vmatpush.bf16.msra.mxu0 %v281
    %297 = vmatpush.bf16.msra.mxu0 %v280
    %298 = vmatpush.bf16.msra.mxu0 %v279
    %299 = vmatpush.bf16.msra.mxu0 %v278
    %300 = vmatpush.bf16.msra.mxu0 %v277
    %301 = vmatmul.bf16.gmra.mxu0 %v213
    %v302 = vpop.f32.mrf.mxu0
    %v303 = vadd.f32 0.0, %v302
    %v304 = vpop.f32.mrf.mxu0
    %v305 = vadd.f32 0.0, %v304
    %306 = vmatmul.bf16.gmra.mxu0 %v214
    %v307 = vpop.f32.mrf.mxu0
    %v308 = vadd.f32 0.0, %v307
    %v309 = vpop.f32.mrf.mxu0
    %v310 = vadd.f32 0.0, %v309
    %311 = vmatmul.bf16.gmra.mxu0 %v215
    %v312 = vpop.f32.mrf.mxu0
    %v313 = vadd.f32 0.0, %v312
    %v314 = vpop.f32.mrf.mxu0
    %v315 = vadd.f32 0.0, %v314
    %316 = vmatmul.bf16.gmra.mxu0 %v216
    %v317 = vpop.f32.mrf.mxu0
    %v318 = vadd.f32 0.0, %v317
    %v319 = vpop.f32.mrf.mxu0
    %v320 = vadd.f32 0.0, %v319
    %321 = vmatmul.bf16.gmra.mxu0 %v217
    %v322 = vpop.f32.mrf.mxu0
    %v323 = vadd.f32 0.0, %v322
    %v324 = vpop.f32.mrf.mxu0
    %v325 = vadd.f32 0.0, %v324
    %326 = vmatmul.bf16.gmra.mxu0 %v218
    %v327 = vpop.f32.mrf.mxu0
    %v328 = vadd.f32 0.0, %v327
    %v329 = vpop.f32.mrf.mxu0
    %v330 = vadd.f32 0.0, %v329
    %331 = vmatmul.bf16.gmra.mxu0 %v219
    %v332 = vpop.f32.mrf.mxu0
    %v333 = vadd.f32 0.0, %v332
    %v334 = vpop.f32.mrf.mxu0
    %v335 = vadd.f32 0.0, %v334
    %336 = vmatmul.bf16.gmra.mxu0 %v220
    %v337 = vpop.f32.mrf.mxu0
    %v338 = vadd.f32 0.0, %v337
    %v339 = vpop.f32.mrf.mxu0
    %v340 = vadd.f32 0.0, %v339
    %341 = vmatmul.bf16.gmra.mxu0 %v221
    %v342 = vpop.f32.mrf.mxu0
    %v343 = vadd.f32 0.0, %v342
    %v344 = vpop.f32.mrf.mxu0
    %v345 = vadd.f32 0.0, %v344
    %346 = vmatmul.bf16.gmra.mxu0 %v222
    %v347 = vpop.f32.mrf.mxu0
    %v348 = vadd.f32 0.0, %v347
    %v349 = vpop.f32.mrf.mxu0
    %v350 = vadd.f32 0.0, %v349
    %351 = vmatmul.bf16.gmra.mxu0 %v223
    %v352 = vpop.f32.mrf.mxu0
    %v353 = vadd.f32 0.0, %v352
    %v354 = vpop.f32.mrf.mxu0
    %v355 = vadd.f32 0.0, %v354
    %356 = vmatmul.bf16.gmra.mxu0 %v224
    %v357 = vpop.f32.mrf.mxu0
    %v358 = vadd.f32 0.0, %v357
    %v359 = vpop.f32.mrf.mxu0
    %v360 = vadd.f32 0.0, %v359
    %361 = vmatmul.bf16.gmra.mxu0 %v225
    %v362 = vpop.f32.mrf.mxu0
    %v363 = vadd.f32 0.0, %v362
    %v364 = vpop.f32.mrf.mxu0
    %v365 = vadd.f32 0.0, %v364
    %366 = vmatmul.bf16.gmra.mxu0 %v226
    %v367 = vpop.f32.mrf.mxu0
    %v368 = vadd.f32 0.0, %v367
    %v369 = vpop.f32.mrf.mxu0
    %v370 = vadd.f32 0.0, %v369
    %371 = vmatmul.bf16.gmra.mxu0 %v227
    %v372 = vpop.f32.mrf.mxu0
    %v373 = vadd.f32 0.0, %v372
    %v374 = vpop.f32.mrf.mxu0
    %v375 = vadd.f32 0.0, %v374
    %376 = vmatmul.bf16.gmra.mxu0 %v228
    %v377 = vpop.f32.mrf.mxu0
    %v378 = vadd.f32 0.0, %v377
    %v379 = vpop.f32.mrf.mxu0
    %v380 = vadd.f32 0.0, %v379
    %381 = vdwg.mxu0
    %v382 = vpack.c.bf16 %v305, %v303
    %v383 = vpack.c.bf16 %v310, %v308
    %v384 = vpack.c.bf16 %v315, %v313
    %v385 = vpack.c.bf16 %v320, %v318
    %v386 = vpack.c.bf16 %v325, %v323
    %v387 = vpack.c.bf16 %v330, %v328
    %v388 = vpack.c.bf16 %v335, %v333
    %v389 = vpack.c.bf16 %v340, %v338
    %v390 = vpack.c.bf16 %v345, %v343
    %v391 = vpack.c.bf16 %v350, %v348
    %v392 = vpack.c.bf16 %v355, %v353
    %v393 = vpack.c.bf16 %v360, %v358
    %v394 = vpack.c.bf16 %v365, %v363
    %v395 = vpack.c.bf16 %v370, %v368
    %v396 = vpack.c.bf16 %v375, %v373
    %v397 = vpack.c.bf16 %v380, %v378
    %v398 = vld [vmem:[#allocation2] sm:$0xff]
    %v399 = vld [vmem:[#allocation2 + $0x8] sm:$0xff]
    %v400 = vld [vmem:[#allocation2 + $0x10] sm:$0xff]
    %v401 = vld [vmem:[#allocation2 + $0x18] sm:$0xff]
    %v402 = vld [vmem:[#allocation2 + $0x20] sm:$0xff]
    %v403 = vld [vmem:[#allocation2 + $0x28] sm:$0xff]
    %v404 = vld [vmem:[#allocation2 + $0x30] sm:$0xff]
    %v405 = vld [vmem:[#allocation2 + $0x38] sm:$0xff]
    %v406 = vld [vmem:[#allocation2 + $0x40] sm:$0xff]
    %v407 = vld [vmem:[#allocation2 + $0x48] sm:$0xff]
    %v408 = vld [vmem:[#allocation2 + $0x50] sm:$0xff]
    %v409 = vld [vmem:[#allocation2 + $0x58] sm:$0xff]
    %v410 = vld [vmem:[#allocation2 + $0x60] sm:$0xff]
    %v411 = vld [vmem:[#allocation2 + $0x68] sm:$0xff]
    %v412 = vld [vmem:[#allocation2 + $0x70] sm:$0xff]
    %v413 = vld [vmem:[#allocation2 + $0x78] sm:$0xff]
    %v414 = vld [vmem:[#allocation2 + $0x80] sm:$0xff]
    %v415 = vld [vmem:[#allocation2 + $0x88] sm:$0xff]
    %v416 = vld [vmem:[#allocation2 + $0x90] sm:$0xff]
    %v417 = vld [vmem:[#allocation2 + $0x98] sm:$0xff]
    %v418 = vld [vmem:[#allocation2 + $0xa0] sm:$0xff]
    %v419 = vld [vmem:[#allocation2 + $0xa8] sm:$0xff]
    %v420 = vld [vmem:[#allocation2 + $0xb0] sm:$0xff]
    %v421 = vld [vmem:[#allocation2 + $0xb8] sm:$0xff]
    %v422 = vld [vmem:[#allocation2 + $0xc0] sm:$0xff]
    %v423 = vld [vmem:[#allocation2 + $0xc8] sm:$0xff]
    %v424 = vld [vmem:[#allocation2 + $0xd0] sm:$0xff]
    %v425 = vld [vmem:[#allocation2 + $0xd8] sm:$0xff]
    %v426 = vld [vmem:[#allocation2 + $0xe0] sm:$0xff]
    %v427 = vld [vmem:[#allocation2 + $0xe8] sm:$0xff]
    %v428 = vld [vmem:[#allocation2 + $0xf0] sm:$0xff]
    %v429 = vld [vmem:[#allocation2 + $0xf8] sm:$0xff]
    %v430 = vld [vmem:[#allocation3] sm:$0xff]
    %v431 = vld [vmem:[#allocation3 + $0x8] sm:$0xff]
    %v432 = vld [vmem:[#allocation3 + $0x10] sm:$0xff]
    %v433 = vld [vmem:[#allocation3 + $0x18] sm:$0xff]
    %v434 = vld [vmem:[#allocation3 + $0x20] sm:$0xff]
    %v435 = vld [vmem:[#allocation3 + $0x28] sm:$0xff]
    %v436 = vld [vmem:[#allocation3 + $0x30] sm:$0xff]
    %v437 = vld [vmem:[#allocation3 + $0x38] sm:$0xff]
    %v438 = vld [vmem:[#allocation3 + $0x40] sm:$0xff]
    %v439 = vld [vmem:[#allocation3 + $0x48] sm:$0xff]
    %v440 = vld [vmem:[#allocation3 + $0x50] sm:$0xff]
    %v441 = vld [vmem:[#allocation3 + $0x58] sm:$0xff]
    %v442 = vld [vmem:[#allocation3 + $0x60] sm:$0xff]
    %v443 = vld [vmem:[#allocation3 + $0x68] sm:$0xff]
    %v444 = vld [vmem:[#allocation3 + $0x70] sm:$0xff]
    %v445 = vld [vmem:[#allocation3 + $0x78] sm:$0xff]
    %v446 = vld [vmem:[#allocation3 + $0x80] sm:$0xff]
    %v447 = vld [vmem:[#allocation3 + $0x88] sm:$0xff]
    %v448 = vld [vmem:[#allocation3 + $0x90] sm:$0xff]
    %v449 = vld [vmem:[#allocation3 + $0x98] sm:$0xff]
    %v450 = vld [vmem:[#allocation3 + $0xa0] sm:$0xff]
    %v451 = vld [vmem:[#allocation3 + $0xa8] sm:$0xff]
    %v452 = vld [vmem:[#allocation3 + $0xb0] sm:$0xff]
    %v453 = vld [vmem:[#allocation3 + $0xb8] sm:$0xff]
    %v454 = vld [vmem:[#allocation3 + $0xc0] sm:$0xff]
    %v455 = vld [vmem:[#allocation3 + $0xc8] sm:$0xff]
    %v456 = vld [vmem:[#allocation3 + $0xd0] sm:$0xff]
    %v457 = vld [vmem:[#allocation3 + $0xd8] sm:$0xff]
    %v458 = vld [vmem:[#allocation3 + $0xe0] sm:$0xff]
    %v459 = vld [vmem:[#allocation3 + $0xe8] sm:$0xff]
    %v460 = vld [vmem:[#allocation3 + $0xf0] sm:$0xff]
    %v461 = vld [vmem:[#allocation3 + $0xf8] sm:$0xff]
    %v494 = vunpack.c.l.b16 %v430
    %v495 = vunpack.c.h.b16 %v430
    %v496 = vunpack.c.l.b16 %v431
    %v497 = vunpack.c.h.b16 %v431
    %v498 = vunpack.c.l.b16 %v432
    %v499 = vunpack.c.h.b16 %v432
    %v500 = vunpack.c.l.b16 %v433
    %v501 = vunpack.c.h.b16 %v433
    %v502 = vunpack.c.l.b16 %v434
    %v503 = vunpack.c.h.b16 %v434
    %v504 = vunpack.c.l.b16 %v435
    %v505 = vunpack.c.h.b16 %v435
    %v506 = vunpack.c.l.b16 %v436
    %v507 = vunpack.c.h.b16 %v436
    %v508 = vunpack.c.l.b16 %v437
    %v509 = vunpack.c.h.b16 %v437
    %v510 = vunpack.c.l.b16 %v438
    %v511 = vunpack.c.h.b16 %v438
    %v512 = vunpack.c.l.b16 %v439
    %v513 = vunpack.c.h.b16 %v439
    %v514 = vunpack.c.l.b16 %v440
    %v515 = vunpack.c.h.b16 %v440
    %v516 = vunpack.c.l.b16 %v441
    %v517 = vunpack.c.h.b16 %v441
    %v518 = vunpack.c.l.b16 %v442
    %v519 = vunpack.c.h.b16 %v442
    %v520 = vunpack.c.l.b16 %v443
    %v521 = vunpack.c.h.b16 %v443
    %v522 = vunpack.c.l.b16 %v444
    %v523 = vunpack.c.h.b16 %v444
    %v524 = vunpack.c.l.b16 %v445
    %v525 = vunpack.c.h.b16 %v445
    %v526 = vunpack.c.l.b16 %v446
    %v527 = vunpack.c.h.b16 %v446
    %v528 = vunpack.c.l.b16 %v447
    %v529 = vunpack.c.h.b16 %v447
    %v530 = vunpack.c.l.b16 %v448
    %v531 = vunpack.c.h.b16 %v448
    %v532 = vunpack.c.l.b16 %v449
    %v533 = vunpack.c.h.b16 %v449
    %v534 = vunpack.c.l.b16 %v450
    %v535 = vunpack.c.h.b16 %v450
    %v536 = vunpack.c.l.b16 %v451
    %v537 = vunpack.c.h.b16 %v451
    %v538 = vunpack.c.l.b16 %v452
    %v539 = vunpack.c.h.b16 %v452
    %v540 = vunpack.c.l.b16 %v453
    %v541 = vunpack.c.h.b16 %v453
    %v542 = vunpack.c.l.b16 %v454
    %v543 = vunpack.c.h.b16 %v454
    %v544 = vunpack.c.l.b16 %v455
    %v545 = vunpack.c.h.b16 %v455
    %v546 = vunpack.c.l.b16 %v456
    %v547 = vunpack.c.h.b16 %v456
    %v548 = vunpack.c.l.b16 %v457
    %v549 = vunpack.c.h.b16 %v457
    %v550 = vunpack.c.l.b16 %v458
    %v551 = vunpack.c.h.b16 %v458
    %v552 = vunpack.c.l.b16 %v459
    %v553 = vunpack.c.h.b16 %v459
    %v554 = vunpack.c.l.b16 %v460
    %v555 = vunpack.c.h.b16 %v460
    %v556 = vunpack.c.l.b16 %v461
    %v557 = vunpack.c.h.b16 %v461
    %v558 = vpack.c.b16 %v496, %v494
    %v559 = vpack.c.b16 %v497, %v495
    %v560 = vpack.c.b16 %v500, %v498
    %v561 = vpack.c.b16 %v501, %v499
    %v562 = vpack.c.b16 %v504, %v502
    %v563 = vpack.c.b16 %v505, %v503
    %v564 = vpack.c.b16 %v508, %v506
    %v565 = vpack.c.b16 %v509, %v507
    %v566 = vpack.c.b16 %v512, %v510
    %v567 = vpack.c.b16 %v513, %v511
    %v568 = vpack.c.b16 %v516, %v514
    %v569 = vpack.c.b16 %v517, %v515
    %v570 = vpack.c.b16 %v520, %v518
    %v571 = vpack.c.b16 %v521, %v519
    %v572 = vpack.c.b16 %v524, %v522
    %v573 = vpack.c.b16 %v525, %v523
    %v574 = vpack.c.b16 %v528, %v526
    %v575 = vpack.c.b16 %v529, %v527
    %v576 = vpack.c.b16 %v532, %v530
    %v577 = vpack.c.b16 %v533, %v531
    %v578 = vpack.c.b16 %v536, %v534
    %v579 = vpack.c.b16 %v537, %v535
    %v580 = vpack.c.b16 %v540, %v538
    %v581 = vpack.c.b16 %v541, %v539
    %v582 = vpack.c.b16 %v544, %v542
    %v583 = vpack.c.b16 %v545, %v543
    %v584 = vpack.c.b16 %v548, %v546
    %v585 = vpack.c.b16 %v549, %v547
    %v586 = vpack.c.b16 %v552, %v550
    %v587 = vpack.c.b16 %v553, %v551
    %v588 = vpack.c.b16 %v556, %v554
    %v589 = vpack.c.b16 %v557, %v555
    %622 = vmatpush.bf16.msra.mxu0 %v389
    %623 = vmatpush.bf16.msra.mxu0 %v388
    %624 = vmatpush.bf16.msra.mxu0 %v387
    %625 = vmatpush.bf16.msra.mxu0 %v386
    %626 = vmatpush.bf16.msra.mxu0 %v385
    %627 = vmatpush.bf16.msra.mxu0 %v384
    %628 = vmatpush.bf16.msra.mxu0 %v383
    %629 = vmatpush.bf16.msra.mxu0 %v382
    %630 = vmatmul.bf16.gmra.mxu0 %v558
    %v631 = vpop.f32.mrf.mxu0
    %v632 = vadd.f32 0.0, %v631
    %v633 = vpop.f32.mrf.mxu0
    %v634 = vadd.f32 0.0, %v633
    %635 = vmatmul.bf16.gmra.mxu0 %v560
    %v636 = vpop.f32.mrf.mxu0
    %v637 = vadd.f32 0.0, %v636
    %v638 = vpop.f32.mrf.mxu0
    %v639 = vadd.f32 0.0, %v638
    %640 = vmatmul.bf16.gmra.mxu0 %v562
    %v641 = vpop.f32.mrf.mxu0
    %v642 = vadd.f32 0.0, %v641
    %v643 = vpop.f32.mrf.mxu0
    %v644 = vadd.f32 0.0, %v643
    %645 = vmatmul.bf16.gmra.mxu0 %v564
    %v646 = vpop.f32.mrf.mxu0
    %v647 = vadd.f32 0.0, %v646
    %v648 = vpop.f32.mrf.mxu0
    %v649 = vadd.f32 0.0, %v648
    %650 = vmatmul.bf16.gmra.mxu0 %v566
    %v651 = vpop.f32.mrf.mxu0
    %v652 = vadd.f32 0.0, %v651
    %v653 = vpop.f32.mrf.mxu0
    %v654 = vadd.f32 0.0, %v653
    %655 = vmatmul.bf16.gmra.mxu0 %v568
    %v656 = vpop.f32.mrf.mxu0
    %v657 = vadd.f32 0.0, %v656
    %v658 = vpop.f32.mrf.mxu0
    %v659 = vadd.f32 0.0, %v658
    %660 = vmatmul.bf16.gmra.mxu0 %v570
    %v661 = vpop.f32.mrf.mxu0
    %v662 = vadd.f32 0.0, %v661
    %v663 = vpop.f32.mrf.mxu0
    %v664 = vadd.f32 0.0, %v663
    %665 = vmatmul.bf16.gmra.mxu0 %v572
    %v666 = vpop.f32.mrf.mxu0
    %v667 = vadd.f32 0.0, %v666
    %v668 = vpop.f32.mrf.mxu0
    %v669 = vadd.f32 0.0, %v668
    %670 = vmatmul.bf16.gmra.mxu0 %v574
    %v671 = vpop.f32.mrf.mxu0
    %v672 = vadd.f32 0.0, %v671
    %v673 = vpop.f32.mrf.mxu0
    %v674 = vadd.f32 0.0, %v673
    %675 = vmatmul.bf16.gmra.mxu0 %v576
    %v676 = vpop.f32.mrf.mxu0
    %v677 = vadd.f32 0.0, %v676
    %v678 = vpop.f32.mrf.mxu0
    %v679 = vadd.f32 0.0, %v678
    %680 = vmatmul.bf16.gmra.mxu0 %v578
    %v681 = vpop.f32.mrf.mxu0
    %v682 = vadd.f32 0.0, %v681
    %v683 = vpop.f32.mrf.mxu0
    %v684 = vadd.f32 0.0, %v683
    %685 = vmatmul.bf16.gmra.mxu0 %v580
    %v686 = vpop.f32.mrf.mxu0
    %v687 = vadd.f32 0.0, %v686
    %v688 = vpop.f32.mrf.mxu0
    %v689 = vadd.f32 0.0, %v688
    %690 = vmatmul.bf16.gmra.mxu0 %v582
    %v691 = vpop.f32.mrf.mxu0
    %v692 = vadd.f32 0.0, %v691
    %v693 = vpop.f32.mrf.mxu0
    %v694 = vadd.f32 0.0, %v693
    %695 = vmatmul.bf16.gmra.mxu0 %v584
    %v696 = vpop.f32.mrf.mxu0
    %v697 = vadd.f32 0.0, %v696
    %v698 = vpop.f32.mrf.mxu0
    %v699 = vadd.f32 0.0, %v698
    %700 = vmatmul.bf16.gmra.mxu0 %v586
    %v701 = vpop.f32.mrf.mxu0
    %v702 = vadd.f32 0.0, %v701
    %v703 = vpop.f32.mrf.mxu0
    %v704 = vadd.f32 0.0, %v703
    %705 = vmatmul.bf16.gmra.mxu0 %v588
    %v706 = vpop.f32.mrf.mxu0
    %v707 = vadd.f32 0.0, %v706
    %v708 = vpop.f32.mrf.mxu0
    %v709 = vadd.f32 0.0, %v708
    %710 = vdwg.mxu0
    %711 = vmatpush.bf16.msra.mxu0 %v397
    %712 = vmatpush.bf16.msra.mxu0 %v396
    %713 = vmatpush.bf16.msra.mxu0 %v395
    %714 = vmatpush.bf16.msra.mxu0 %v394
    %715 = vmatpush.bf16.msra.mxu0 %v393
    %716 = vmatpush.bf16.msra.mxu0 %v392
    %717 = vmatpush.bf16.msra.mxu0 %v391
    %718 = vmatpush.bf16.msra.mxu0 %v390
    %719 = vmatmul.bf16.gmra.mxu0 %v559
    %v720 = vpop.f32.mrf.mxu0
    %v721 = vadd.f32 %v632, %v720
    %v722 = vpop.f32.mrf.mxu0
    %v723 = vadd.f32 %v634, %v722
    %724 = vmatmul.bf16.gmra.mxu0 %v561
    %v725 = vpop.f32.mrf.mxu0
    %v726 = vadd.f32 %v637, %v725
    %v727 = vpop.f32.mrf.mxu0
    %v728 = vadd.f32 %v639, %v727
    %729 = vmatmul.bf16.gmra.mxu0 %v563
    %v730 = vpop.f32.mrf.mxu0
    %v731 = vadd.f32 %v642, %v730
    %v732 = vpop.f32.mrf.mxu0
    %v733 = vadd.f32 %v644, %v732
    %734 = vmatmul.bf16.gmra.mxu0 %v565
    %v735 = vpop.f32.mrf.mxu0
    %v736 = vadd.f32 %v647, %v735
    %v737 = vpop.f32.mrf.mxu0
    %v738 = vadd.f32 %v649, %v737
    %739 = vmatmul.bf16.gmra.mxu0 %v567
    %v740 = vpop.f32.mrf.mxu0
    %v741 = vadd.f32 %v652, %v740
    %v742 = vpop.f32.mrf.mxu0
    %v743 = vadd.f32 %v654, %v742
    %744 = vmatmul.bf16.gmra.mxu0 %v569
    %v745 = vpop.f32.mrf.mxu0
    %v746 = vadd.f32 %v657, %v745
    %v747 = vpop.f32.mrf.mxu0
    %v748 = vadd.f32 %v659, %v747
    %749 = vmatmul.bf16.gmra.mxu0 %v571
    %v750 = vpop.f32.mrf.mxu0
    %v751 = vadd.f32 %v662, %v750
    %v752 = vpop.f32.mrf.mxu0
    %v753 = vadd.f32 %v664, %v752
    %754 = vmatmul.bf16.gmra.mxu0 %v573
    %v755 = vpop.f32.mrf.mxu0
    %v756 = vadd.f32 %v667, %v755
    %v757 = vpop.f32.mrf.mxu0
    %v758 = vadd.f32 %v669, %v757
    %759 = vmatmul.bf16.gmra.mxu0 %v575
    %v760 = vpop.f32.mrf.mxu0
    %v761 = vadd.f32 %v672, %v760
    %v762 = vpop.f32.mrf.mxu0
    %v763 = vadd.f32 %v674, %v762
    %764 = vmatmul.bf16.gmra.mxu0 %v577
    %v765 = vpop.f32.mrf.mxu0
    %v766 = vadd.f32 %v677, %v765
    %v767 = vpop.f32.mrf.mxu0
    %v768 = vadd.f32 %v679, %v767
    %769 = vmatmul.bf16.gmra.mxu0 %v579
    %v770 = vpop.f32.mrf.mxu0
    %v771 = vadd.f32 %v682, %v770
    %v772 = vpop.f32.mrf.mxu0
    %v773 = vadd.f32 %v684, %v772
    %774 = vmatmul.bf16.gmra.mxu0 %v581
    %v775 = vpop.f32.mrf.mxu0
    %v776 = vadd.f32 %v687, %v775
    %v777 = vpop.f32.mrf.mxu0
    %v778 = vadd.f32 %v689, %v777
    %779 = vmatmul.bf16.gmra.mxu0 %v583
    %v780 = vpop.f32.mrf.mxu0
    %v781 = vadd.f32 %v692, %v780
    %v782 = vpop.f32.mrf.mxu0
    %v783 = vadd.f32 %v694, %v782
    %784 = vmatmul.bf16.gmra.mxu0 %v585
    %v785 = vpop.f32.mrf.mxu0
    %v786 = vadd.f32 %v697, %v785
    %v787 = vpop.f32.mrf.mxu0
    %v788 = vadd.f32 %v699, %v787
    %789 = vmatmul.bf16.gmra.mxu0 %v587
    %v790 = vpop.f32.mrf.mxu0
    %v791 = vadd.f32 %v702, %v790
    %v792 = vpop.f32.mrf.mxu0
    %v793 = vadd.f32 %v704, %v792
    %794 = vmatmul.bf16.gmra.mxu0 %v589
    %v795 = vpop.f32.mrf.mxu0
    %v796 = vadd.f32 %v707, %v795
    %v797 = vpop.f32.mrf.mxu0
    %v798 = vadd.f32 %v709, %v797
    %799 = vdwg.mxu0
    %v800 = vadd.f32 %v398, %v721
    %v801 = vadd.f32 %v399, %v723
    %v802 = vadd.f32 %v400, %v726
    %v803 = vadd.f32 %v401, %v728
    %v804 = vadd.f32 %v402, %v731
    %v805 = vadd.f32 %v403, %v733
    %v806 = vadd.f32 %v404, %v736
    %v807 = vadd.f32 %v405, %v738
    %v808 = vadd.f32 %v406, %v741
    %v809 = vadd.f32 %v407, %v743
    %v810 = vadd.f32 %v408, %v746
    %v811 = vadd.f32 %v409, %v748
    %v812 = vadd.f32 %v410, %v751
    %v813 = vadd.f32 %v411, %v753
    %v814 = vadd.f32 %v412, %v756
    %v815 = vadd.f32 %v413, %v758
    %v816 = vadd.f32 %v414, %v761
    %v817 = vadd.f32 %v415, %v763
    %v818 = vadd.f32 %v416, %v766
    %v819 = vadd.f32 %v417, %v768
    %v820 = vadd.f32 %v418, %v771
    %v821 = vadd.f32 %v419, %v773
    %v822 = vadd.f32 %v420, %v776
    %v823 = vadd.f32 %v421, %v778
    %v824 = vadd.f32 %v422, %v781
    %v825 = vadd.f32 %v423, %v783
    %v826 = vadd.f32 %v424, %v786
    %v827 = vadd.f32 %v425, %v788
    %v828 = vadd.f32 %v426, %v791
    %v829 = vadd.f32 %v427, %v793
    %v830 = vadd.f32 %v428, %v796
    %v831 = vadd.f32 %v429, %v798
    %832 = vst [vmem:[#allocation2] sm:$0xff] %v800
    %833 = vst [vmem:[#allocation2 + $0x8] sm:$0xff] %v801
    %834 = vst [vmem:[#allocation2 + $0x10] sm:$0xff] %v802
    %835 = vst [vmem:[#allocation2 + $0x18] sm:$0xff] %v803
    %836 = vst [vmem:[#allocation2 + $0x20] sm:$0xff] %v804
    %837 = vst [vmem:[#allocation2 + $0x28] sm:$0xff] %v805
    %838 = vst [vmem:[#allocation2 + $0x30] sm:$0xff] %v806
    %839 = vst [vmem:[#allocation2 + $0x38] sm:$0xff] %v807
    %840 = vst [vmem:[#allocation2 + $0x40] sm:$0xff] %v808
    %841 = vst [vmem:[#allocation2 + $0x48] sm:$0xff] %v809
    %842 = vst [vmem:[#allocation2 + $0x50] sm:$0xff] %v810
    %843 = vst [vmem:[#allocation2 + $0x58] sm:$0xff] %v811
    %844 = vst [vmem:[#allocation2 + $0x60] sm:$0xff] %v812
    %845 = vst [vmem:[#allocation2 + $0x68] sm:$0xff] %v813
    %846 = vst [vmem:[#allocation2 + $0x70] sm:$0xff] %v814
    %847 = vst [vmem:[#allocation2 + $0x78] sm:$0xff] %v815
    %848 = vst [vmem:[#allocation2 + $0x80] sm:$0xff] %v816
    %849 = vst [vmem:[#allocation2 + $0x88] sm:$0xff] %v817
    %850 = vst [vmem:[#allocation2 + $0x90] sm:$0xff] %v818
    %851 = vst [vmem:[#allocation2 + $0x98] sm:$0xff] %v819
    %852 = vst [vmem:[#allocation2 + $0xa0] sm:$0xff] %v820
    %853 = vst [vmem:[#allocation2 + $0xa8] sm:$0xff] %v821
    %854 = vst [vmem:[#allocation2 + $0xb0] sm:$0xff] %v822
    %855 = vst [vmem:[#allocation2 + $0xb8] sm:$0xff] %v823
    %856 = vst [vmem:[#allocation2 + $0xc0] sm:$0xff] %v824
    %857 = vst [vmem:[#allocation2 + $0xc8] sm:$0xff] %v825
    %858 = vst [vmem:[#allocation2 + $0xd0] sm:$0xff] %v826
    %859 = vst [vmem:[#allocation2 + $0xd8] sm:$0xff] %v827
    %860 = vst [vmem:[#allocation2 + $0xe0] sm:$0xff] %v828
    %861 = vst [vmem:[#allocation2 + $0xe8] sm:$0xff] %v829
    %862 = vst [vmem:[#allocation2 + $0xf0] sm:$0xff] %v830
    %863 = vst [vmem:[#allocation2 + $0xf8] sm:$0xff] %v831
    // Predicated region
    $region34: #{tpu_custom_call.1} parent=1 // pred_check
      %p864 = pneg %p65
    $region35: #{tpu_custom_call.1} parent=1 // pred_check_branch
      %866 = sbr.rel (%p864) target = $region37
    $region36: #{tpu_custom_call.1} parent=1 // pred_region
      %v867 = vld [vmem:[#allocation2] sm:$0xff]
      %v868 = vld [vmem:[#allocation2 + $0x8] sm:$0xff]
      %v869 = vld [vmem:[#allocation2 + $0x10] sm:$0xff]
      %v870 = vld [vmem:[#allocation2 + $0x18] sm:$0xff]
      %v871 = vld [vmem:[#allocation2 + $0x20] sm:$0xff]
      %v872 = vld [vmem:[#allocation2 + $0x28] sm:$0xff]
      %v873 = vld [vmem:[#allocation2 + $0x30] sm:$0xff]
      %v874 = vld [vmem:[#allocation2 + $0x38] sm:$0xff]
      %v875 = vld [vmem:[#allocation2 + $0x40] sm:$0xff]
      %v876 = vld [vmem:[#allocation2 + $0x48] sm:$0xff]
      %v877 = vld [vmem:[#allocation2 + $0x50] sm:$0xff]
      %v878 = vld [vmem:[#allocation2 + $0x58] sm:$0xff]
      %v879 = vld [vmem:[#allocation2 + $0x60] sm:$0xff]
      %v880 = vld [vmem:[#allocation2 + $0x68] sm:$0xff]
      %v881 = vld [vmem:[#allocation2 + $0x70] sm:$0xff]
      %v882 = vld [vmem:[#allocation2 + $0x78] sm:$0xff]
      %v883 = vld [vmem:[#allocation2 + $0x80] sm:$0xff]
      %v884 = vld [vmem:[#allocation2 + $0x88] sm:$0xff]
      %v885 = vld [vmem:[#allocation2 + $0x90] sm:$0xff]
      %v886 = vld [vmem:[#allocation2 + $0x98] sm:$0xff]
      %v887 = vld [vmem:[#allocation2 + $0xa0] sm:$0xff]
      %v888 = vld [vmem:[#allocation2 + $0xa8] sm:$0xff]
      %v889 = vld [vmem:[#allocation2 + $0xb0] sm:$0xff]
      %v890 = vld [vmem:[#allocation2 + $0xb8] sm:$0xff]
      %v891 = vld [vmem:[#allocation2 + $0xc0] sm:$0xff]
      %v892 = vld [vmem:[#allocation2 + $0xc8] sm:$0xff]
      %v893 = vld [vmem:[#allocation2 + $0xd0] sm:$0xff]
      %v894 = vld [vmem:[#allocation2 + $0xd8] sm:$0xff]
      %v895 = vld [vmem:[#allocation2 + $0xe0] sm:$0xff]
      %v896 = vld [vmem:[#allocation2 + $0xe8] sm:$0xff]
      %v897 = vld [vmem:[#allocation2 + $0xf0] sm:$0xff]
      %v898 = vld [vmem:[#allocation2 + $0xf8] sm:$0xff]
      %v899 = vld [vmem:[%s3] sm:$0x1]
      %v901 = vperm.slane %v899, 0
      %v903 = vadd.f32 %v867, %v901
      %v904 = vadd.f32 %v868, %v901
      %v905 = vadd.f32 %v869, %v901
      %v906 = vadd.f32 %v870, %v901
      %v907 = vadd.f32 %v871, %v901
      %v908 = vadd.f32 %v872, %v901
      %v909 = vadd.f32 %v873, %v901
      %v910 = vadd.f32 %v874, %v901
      %v911 = vadd.f32 %v875, %v901
      %v912 = vadd.f32 %v876, %v901
      %v913 = vadd.f32 %v877, %v901
      %v914 = vadd.f32 %v878, %v901
      %v915 = vadd.f32 %v879, %v901
      %v916 = vadd.f32 %v880, %v901
      %v917 = vadd.f32 %v881, %v901
      %v918 = vadd.f32 %v882, %v901
      %v919 = vadd.f32 %v883, %v901
      %v920 = vadd.f32 %v884, %v901
      %v921 = vadd.f32 %v885, %v901
      %v922 = vadd.f32 %v886, %v901
      %v923 = vadd.f32 %v887, %v901
      %v924 = vadd.f32 %v888, %v901
      %v925 = vadd.f32 %v889, %v901
      %v926 = vadd.f32 %v890, %v901
      %v927 = vadd.f32 %v891, %v901
      %v928 = vadd.f32 %v892, %v901
      %v929 = vadd.f32 %v893, %v901
      %v930 = vadd.f32 %v894, %v901
      %v931 = vadd.f32 %v895, %v901
      %v932 = vadd.f32 %v896, %v901
      %v933 = vadd.f32 %v897, %v901
      %v934 = vadd.f32 %v898, %v901
      %v935 = vmax.f32 %v903, 0.0
      %v936 = vmax.f32 %v904, 0.0
      %v937 = vmax.f32 %v905, 0.0
      %v938 = vmax.f32 %v906, 0.0
      %v939 = vmax.f32 %v907, 0.0
      %v940 = vmax.f32 %v908, 0.0
      %v941 = vmax.f32 %v909, 0.0
      %v942 = vmax.f32 %v910, 0.0
      %v943 = vmax.f32 %v911, 0.0
      %v944 = vmax.f32 %v912, 0.0
      %v945 = vmax.f32 %v913, 0.0
      %v946 = vmax.f32 %v914, 0.0
      %v947 = vmax.f32 %v915, 0.0
      %v948 = vmax.f32 %v916, 0.0
      %v949 = vmax.f32 %v917, 0.0
      %v950 = vmax.f32 %v918, 0.0
      %v951 = vmax.f32 %v919, 0.0
      %v952 = vmax.f32 %v920, 0.0
      %v953 = vmax.f32 %v921, 0.0
      %v954 = vmax.f32 %v922, 0.0
      %v955 = vmax.f32 %v923, 0.0
      %v956 = vmax.f32 %v924, 0.0
      %v957 = vmax.f32 %v925, 0.0
      %v958 = vmax.f32 %v926, 0.0
      %v959 = vmax.f32 %v927, 0.0
      %v960 = vmax.f32 %v928, 0.0
      %v961 = vmax.f32 %v929, 0.0
      %v962 = vmax.f32 %v930, 0.0
      %v963 = vmax.f32 %v931, 0.0
      %v964 = vmax.f32 %v932, 0.0
      %v965 = vmax.f32 %v933, 0.0
      %v966 = vmax.f32 %v934, 0.0
      %v967 = vpack.c.bf16 %v935, %v935
      %v968 = vpack.c.bf16 %v936, %v936
      %v969 = vpack.c.bf16 %v937, %v937
      %v970 = vpack.c.bf16 %v938, %v938
      %v971 = vpack.c.bf16 %v939, %v939
      %v972 = vpack.c.bf16 %v940, %v940
      %v973 = vpack.c.bf16 %v941, %v941
      %v974 = vpack.c.bf16 %v942, %v942
      %v975 = vpack.c.bf16 %v943, %v943
      %v976 = vpack.c.bf16 %v944, %v944
      %v977 = vpack.c.bf16 %v945, %v945
      %v978 = vpack.c.bf16 %v946, %v946
      %v979 = vpack.c.bf16 %v947, %v947
      %v980 = vpack.c.bf16 %v948, %v948
      %v981 = vpack.c.bf16 %v949, %v949
      %v982 = vpack.c.bf16 %v950, %v950
      %v983 = vpack.c.bf16 %v951, %v951
      %v984 = vpack.c.bf16 %v952, %v952
      %v985 = vpack.c.bf16 %v953, %v953
      %v986 = vpack.c.bf16 %v954, %v954
      %v987 = vpack.c.bf16 %v955, %v955
      %v988 = vpack.c.bf16 %v956, %v956
      %v989 = vpack.c.bf16 %v957, %v957
      %v990 = vpack.c.bf16 %v958, %v958
      %v991 = vpack.c.bf16 %v959, %v959
      %v992 = vpack.c.bf16 %v960, %v960
      %v993 = vpack.c.bf16 %v961, %v961
      %v994 = vpack.c.bf16 %v962, %v962
      %v995 = vpack.c.bf16 %v963, %v963
      %v996 = vpack.c.bf16 %v964, %v964
      %v997 = vpack.c.bf16 %v965, %v965
      %v998 = vpack.c.bf16 %v966, %v966
      %999 = vst [vmem:[#allocation9] sm:$0xf] %v967
      %1000 = vst [vmem:[#allocation9 + $0x4] sm:$0xf] %v968
      %1001 = vst [vmem:[#allocation9 + $0x8] sm:$0xf] %v969
      %1002 = vst [vmem:[#allocation9 + $0xc] sm:$0xf] %v970
      %1003 = vst [vmem:[#allocation9 + $0x10] sm:$0xf] %v971
      %1004 = vst [vmem:[#allocation9 + $0x14] sm:$0xf] %v972
      %1005 = vst [vmem:[#allocation9 + $0x18] sm:$0xf] %v973
      %1006 = vst [vmem:[#allocation9 + $0x1c] sm:$0xf] %v974
      %1007 = vst [vmem:[#allocation9 + $0x20] sm:$0xf] %v975
      %1008 = vst [vmem:[#allocation9 + $0x24] sm:$0xf] %v976
      %1009 = vst [vmem:[#allocation9 + $0x28] sm:$0xf] %v977
      %1010 = vst [vmem:[#allocation9 + $0x2c] sm:$0xf] %v978
      %1011 = vst [vmem:[#allocation9 + $0x30] sm:$0xf] %v979
      %1012 = vst [vmem:[#allocation9 + $0x34] sm:$0xf] %v980
      %1013 = vst [vmem:[#allocation9 + $0x38] sm:$0xf] %v981
      %1014 = vst [vmem:[#allocation9 + $0x3c] sm:$0xf] %v982
      %1015 = vst [vmem:[#allocation9 + $0x40] sm:$0xf] %v983
      %1016 = vst [vmem:[#allocation9 + $0x44] sm:$0xf] %v984
      %1017 = vst [vmem:[#allocation9 + $0x48] sm:$0xf] %v985
      %1018 = vst [vmem:[#allocation9 + $0x4c] sm:$0xf] %v986
      %1019 = vst [vmem:[#allocation9 + $0x50] sm:$0xf] %v987
      %1020 = vst [vmem:[#allocation9 + $0x54] sm:$0xf] %v988
      %1021 = vst [vmem:[#allocation9 + $0x58] sm:$0xf] %v989
      %1022 = vst [vmem:[#allocation9 + $0x5c] sm:$0xf] %v990
      %1023 = vst [vmem:[#allocation9 + $0x60] sm:$0xf] %v991
      %1024 = vst [vmem:[#allocation9 + $0x64] sm:$0xf] %v992
      %1025 = vst [vmem:[#allocation9 + $0x68] sm:$0xf] %v993
      %1026 = vst [vmem:[#allocation9 + $0x6c] sm:$0xf] %v994
      %1027 = vst [vmem:[#allocation9 + $0x70] sm:$0xf] %v995
      %1028 = vst [vmem:[#allocation9 + $0x74] sm:$0xf] %v996
      %1029 = vst [vmem:[#allocation9 + $0x78] sm:$0xf] %v997
      %1030 = vst [vmem:[#allocation9 + $0x7c] sm:$0xf] %v998
    $region37: #{tpu_custom_call.1} parent=1 // pred_fallthru
      _
    // Predicated region
    $region38: #{tpu_custom_call.1} parent=1 // pred_check
      _
    $region39: #{tpu_custom_call.1} parent=1 // pred_check_branch
      %1032 = sbr.rel (0) target = $region41
    $region40: #{tpu_custom_call.1} parent=1 // pred_region
      %1034 = vsyncadd [#allocation5], 0
      %s1035 = sshll.u32 [#allocation9], 4
      %s1036 = int_to_ptr.vmem [resolvable:$true] %s1035
      %s1037 = sshll.u32 %s4, 4
      %s1038 = int_to_ptr.hbm [resolvable:$true] %s1037
      %1043 = dma.vmem_to_hbm [thread:$0]  %s1036, 2048, %s1038, [#allocation5], 64, 64, 4
    $region41: #{tpu_custom_call.1} parent=1 // pred_fallthru
      _
    // Predicated region
    $region42: #{tpu_custom_call.1} parent=1 // pred_check
      _
    $region43: #{tpu_custom_call.1} parent=1 // pred_check_branch
      %1045 = sbr.rel (0) target = $region45
    $region44: #{tpu_custom_call.1} parent=1 // pred_region
      %1047 = dma.done [#allocation5], 2048
    $region45: #{tpu_custom_call.1} parent=1 // pred_fallthru
      _
    %1048 = vsyncpa [#allocation4], 1
    %1049 = vsyncpa [#allocation7], 1
    %1050 = vsyncpa [#allocation5], 1

</llo_original>
